<compile_context>
chip_gen: v6e
topology: v6e:2x2x1
jax: 0.10.0
libtpu: 0.0.40
codegen_flags: <defaults>
</compile_context>

<pallas_src>
import functools

import jax
import jax.numpy as jnp
from jax.experimental import pallas as pl
from jax.experimental.pallas import tpu as pltpu


_LANE = 128          # lane width; padded class dim for lane-dense output
_SUBLANE_BF16 = 16   # bf16 sublane packing -> pad node dim to multiple of 16


# ----------------------------- Pallas kernel -------------------------------

def _gcn_fused_kernel(a_ref, x_ref,
                      w1_ref, b1_ref, w2_ref, b2_ref,
                      w3_ref, b3_ref, w4_ref, b4_ref,
                      o_ref, *, num_classes):
    f32 = jnp.float32
    bf16 = jnp.bfloat16

    a = a_ref[...]          # [N, N] bf16 normalized adjacency, resident for all layers
    h = x_ref[...]          # [N, F_in] bf16

    # Layer 1: F_in (32) < F_out (128)  ->  (A @ H) @ W1  (cheaper N^2 term)
    h = jnp.dot(a, h, preferred_element_type=f32).astype(bf16)
    h = jnp.dot(h, w1_ref[...], preferred_element_type=f32) + b1_ref[...]
    h = jnp.maximum(h, 0.0).astype(bf16)

    # Layer 2: 128 < 256  ->  (A @ H) @ W2
    h = jnp.dot(a, h, preferred_element_type=f32).astype(bf16)
    h = jnp.dot(h, w2_ref[...], preferred_element_type=f32) + b2_ref[...]
    h = jnp.maximum(h, 0.0).astype(bf16)

    # Layer 3: 256 >= 128  ->  A @ (H @ W3)
    h = jnp.dot(h, w3_ref[...], preferred_element_type=f32).astype(bf16)
    h = jnp.dot(a, h, preferred_element_type=f32) + b3_ref[...]
    h = jnp.maximum(h, 0.0).astype(bf16)

    # Layer 4 (lane-dense padded W4): A @ (H @ W4_pad), no ReLU
    h = jnp.dot(h, w4_ref[...], preferred_element_type=f32).astype(bf16)
    h = jnp.dot(a, h, preferred_element_type=f32) + b4_ref[...]      # [N, 128] f32

    # Mask padded class columns to -inf so they cannot corrupt the logsumexp.
    col = jax.lax.broadcasted_iota(jnp.int32, h.shape, 1)
    h = jnp.where(col < num_classes, h, -jnp.inf)

    # Fused log_softmax(dim=1) epilogue (max-subtracted, f32).
    m = jnp.max(h, axis=1, keepdims=True)
    s = h - m
    lse = jnp.log(jnp.sum(jnp.exp(s), axis=1, keepdims=True))
    o_ref[...] = (s - lse).astype(o_ref.dtype)


# ------------------------------ wrapper -------------------------------------

def _round_up(n, m):
    return -(-n // m) * m


def normalized_adjacency(edge_index, num_nodes):
    """Dense D^{-1/2} (A + I) D^{-1/2}  (PyG GCNConv default normalization)."""
    src, dst = edge_index[0], edge_index[1]
    a = jnp.zeros((num_nodes, num_nodes), jnp.float32)
    a = a.at[dst, src].add(1.0)                       # message: src -> dst
    a = a + jnp.eye(num_nodes, dtype=jnp.float32)     # self loops
    deg = jnp.sum(a, axis=1)
    d_inv_sqrt = jnp.where(deg > 0, jax.lax.rsqrt(deg), 0.0)
    return d_inv_sqrt[:, None] * a * d_inv_sqrt[None, :]


@jax.jit
def gcn_forward(x, edge_index, params):
    n, f_in = x.shape
    h1 = params["w1"].shape[1]
    h2 = params["w2"].shape[1]
    h3 = params["w3"].shape[1]
    num_classes = params["w4"].shape[1]

    # Adjacency build (scatter-add + rsqrt) fused under the same jit.
    a_hat = normalized_adjacency(edge_index, n)

    # Pad node dim to a multiple of 16 (bf16 sublane packing).  Padded
    # rows/cols of A_hat and X are zero, so real rows are unaffected.
    n_pad = _round_up(n, _SUBLANE_BF16)
    if n_pad != n:
        a_hat = jnp.pad(a_hat, ((0, n_pad - n), (0, n_pad - n)))
        x = jnp.pad(x, ((0, n_pad - n), (0, 0)))

    # Lane-dense final projection: zero-pad W4/b4 to 128 output columns.
    c_pad = _LANE
    w4p = jnp.pad(params["w4"], ((0, 0), (0, c_pad - num_classes)))
    b4p = jnp.pad(params["b4"], ((0, 0), (0, c_pad - num_classes)))

    # bf16 MXU operands; biases stay f32 (f32 accumulate + f32 epilogue).
    a_bf = a_hat.astype(jnp.bfloat16)
    x_bf = x.astype(jnp.bfloat16)
    w1 = params["w1"].astype(jnp.bfloat16)
    w2 = params["w2"].astype(jnp.bfloat16)
    w3 = params["w3"].astype(jnp.bfloat16)
    w4 = w4p.astype(jnp.bfloat16)

    flops = 2 * n_pad * (
        n_pad * f_in + f_in * h1              # layer 1: (A@H)@W1
        + n_pad * h1 + h1 * h2                # layer 2: (A@H)@W2
        + h2 * h3 + n_pad * h3                # layer 3: A@(H@W3)
        + h3 * c_pad + n_pad * c_pad          # layer 4: A@(H@W4_pad)
    )
    input_bytes = (
        2 * (a_bf.size + x_bf.size + w1.size + w2.size + w3.size + w4.size)
        + 4 * (params["b1"].size + params["b2"].size
               + params["b3"].size + b4p.size))
    bytes_accessed = input_bytes + 4 * n_pad * c_pad
    cost = pl.CostEstimate(
        flops=int(flops),
        transcendentals=int(n_pad * (c_pad + 1)),   # exp per column + log per row
        bytes_accessed=int(bytes_accessed),
    )

    # Everything-resident VMEM footprint + headroom (explicit limit so scaling
    # N doesn't silently hit the per-generation scoped-VMEM defaults).
    activ_bytes = 4 * n_pad * (h1 + h2 + h3 + c_pad)
    vmem_limit = int(min(100 * 1024 * 1024,
                         max(4 * (input_bytes + activ_bytes + 4 * n_pad * c_pad),
                             8 * 1024 * 1024)))

    vmem_spec = pl.BlockSpec(memory_space=pltpu.MemorySpace.VMEM)
    kernel = functools.partial(_gcn_fused_kernel, num_classes=num_classes)

    out = pl.pallas_call(
        kernel,
        out_shape=jax.ShapeDtypeStruct((n_pad, c_pad), jnp.float32),
        in_specs=[vmem_spec] * 10,
        out_specs=vmem_spec,
        cost_estimate=cost,
        compiler_params=pltpu.CompilerParams(vmem_limit_bytes=vmem_limit),
    )(a_bf, x_bf,
      w1, params["b1"], w2, params["b2"],
      w3, params["b3"], w4, b4p)

    return out[:n, :num_classes]


# --------------------------- params / references -----------------------------

def glorot(key, shape):
    fan_in, fan_out = shape
    limit = (6.0 / (fan_in + fan_out)) ** 0.5
    return jax.random.uniform(key, shape, jnp.float32, -limit, limit)


def init_params(key, num_features, num_classes):
    dims = [(num_features, 128), (128, 256), (256, 128), (128, num_classes)]
    params = {}
    for i, (fi, fo) in enumerate(dims, start=1):
        key, sub = jax.random.split(key)
        params[f"w{i}"] = glorot(sub, (fi, fo))
        params[f"b{i}"] = jnp.zeros((1, fo), jnp.float32)   # GCNConv bias init = zeros
    return params


def gcn_ref_f32(x, edge_index, params):
    """Pure-JAX f32 reference (canonical A @ (X @ W) order)."""
    a = normalized_adjacency(edge_index, x.shape[0])
    h = x
    for i in range(1, 5):
        h = a @ (h @ params[f"w{i}"]) + params[f"b{i}"]
        if i < 4:
            h = jnp.maximum(h, 0.0)
    return jax.nn.log_softmax(h, axis=1)


def gcn_ref_bf16(x, edge_index, params):
    """Plain-JAX reference mirroring the kernel's bf16-operand / f32-accum path."""
    bf, f32 = jnp.bfloat16, jnp.float32
    a = normalized_adjacency(edge_index, x.shape[0]).astype(bf)
    h = x.astype(bf)
    for i in (1, 2):   # (A @ H) @ W
        h = jnp.dot(a, h, preferred_element_type=f32).astype(bf)
        h = jnp.dot(h, params[f"w{i}"].astype(bf),
                    preferred_element_type=f32) + params[f"b{i}"]
        h = jnp.maximum(h, 0.0).astype(bf)
    for i in (3, 4):   # A @ (H @ W)
        h = jnp.dot(h, params[f"w{i}"].astype(bf),
                    preferred_element_type=f32).astype(bf)
        h = jnp.dot(a, h, preferred_element_type=f32) + params[f"b{i}"]
        if i < 4:
            h = jnp.maximum(h, 0.0).astype(bf)
    return jax.nn.log_softmax(h, axis=1)


# --------------------------------- main --------------------------------------

if __name__ == "__main__":
    key = jax.random.PRNGKey(0)

    num_nodes = 16          # N genes
    num_features = 32       # data.num_node_features
    num_classes = 4         # len(np.unique(gene_labels))

    # deterministic "standardized" node features
    key, kx = jax.random.split(key)
    x = jax.random.normal(kx, (num_nodes, num_features), jnp.float32)

    # simple undirected ring graph as edge_index [2, E]
    src = jnp.arange(num_nodes, dtype=jnp.int32)
    dst = (src + 1) % num_nodes
    edge_index = jnp.stack(
        [jnp.concatenate([src, dst]), jnp.concatenate([dst, src])], axis=0
    )

    params = init_params(key, num_features, num_classes)

    out = gcn_forward(x, edge_index, params)
    out = jax.block_until_ready(out)

    assert out.shape == (num_nodes, num_classes)
    # rows of log_softmax should exp-sum to 1
    assert jnp.allclose(jnp.sum(jnp.exp(out), axis=1), 1.0, atol=1e-3)
    # kernel correctness vs. a plain-JAX reference using the same bf16 path
    ref_bf = gcn_ref_bf16(x, edge_index, params)
    assert jnp.allclose(out, ref_bf, atol=2e-2, rtol=2e-2)
    # semantics sanity vs. the full-f32 reference (loose tol: bf16 MXU operands)
    ref32 = gcn_ref_f32(x, edge_index, params)
    assert jnp.allclose(out, ref32, atol=2e-1, rtol=1e-1)
    print("KERNEL_OK")
</pallas_src>

<mosaic_0001>
module attributes {stable_mosaic.version = 11 : i64} {
  func.func private @main(%arg0: i32) attributes {dimension_semantics = [#tpu.dimension_semantics<core_parallel>], iteration_bounds = array<i64: 2>, tpu.core_type = #tpu.core_type<sc_scalar_subcore>, window_params = []} {
    return
  }
}

module attributes {stable_mosaic.version = 11 : i64} {
  func.func private @main(%arg0: i32) attributes {dimension_semantics = [#tpu.dimension_semantics<core_parallel>], iteration_bounds = array<i64: 2>, tpu.core_type = #tpu.core_type<sc_scalar_subcore>, window_params = []} {
    return
  }
}

module attributes {stable_mosaic.version = 11 : i64} {
  func.func @_gcn_fused_kernel(%arg0: memref<16x16xbf16, #tpu.memory_space<vmem>>, %arg1: memref<16x32xbf16, #tpu.memory_space<vmem>>, %arg2: memref<32x128xbf16, #tpu.memory_space<vmem>>, %arg3: memref<1x128xf32, #tpu.memory_space<vmem>>, %arg4: memref<128x256xbf16, #tpu.memory_space<vmem>>, %arg5: memref<1x256xf32, #tpu.memory_space<vmem>>, %arg6: memref<256x128xbf16, #tpu.memory_space<vmem>>, %arg7: memref<1x128xf32, #tpu.memory_space<vmem>>, %arg8: memref<128x128xbf16, #tpu.memory_space<vmem>>, %arg9: memref<1x128xf32, #tpu.memory_space<vmem>>, %arg10: memref<16x128xf32, #tpu.memory_space<vmem>>) attributes {dimension_semantics = [], scalar_prefetch = 0 : i64, scratch_operands = 0 : i64, tpu.core_type = #tpu.core_type<tc>} {
    %c0 = arith.constant 0 : index
    %c0_0 = arith.constant 0 : index
    %0 = vector.load %arg0[%c0, %c0_0] : memref<16x16xbf16, #tpu.memory_space<vmem>>, vector<16x16xbf16>
    %c0_1 = arith.constant 0 : index
    %c0_2 = arith.constant 0 : index
    %1 = vector.load %arg1[%c0_1, %c0_2] : memref<16x32xbf16, #tpu.memory_space<vmem>>, vector<16x32xbf16>
    %cst = arith.constant dense<0.000000e+00> : vector<16x32xf32>
    %2 = tpu.matmul %0, %1, %cst {dimension_numbers = #tpu.dot_dimension_numbers<[1], [0], [0], [1], [0, 0, 1, 1], [], []>} : vector<16x16xbf16>, vector<16x32xbf16>, vector<16x32xf32> -> vector<16x32xf32>
    %3 = arith.truncf %2 : vector<16x32xf32> to vector<16x32xbf16>
    %c0_3 = arith.constant 0 : index
    %c0_4 = arith.constant 0 : index
    %4 = vector.load %arg2[%c0_3, %c0_4] : memref<32x128xbf16, #tpu.memory_space<vmem>>, vector<32x128xbf16>
    %cst_5 = arith.constant dense<0.000000e+00> : vector<16x128xf32>
    %5 = tpu.matmul %3, %4, %cst_5 {dimension_numbers = #tpu.dot_dimension_numbers<[1], [0], [0], [1], [0, 0, 1, 1], [], []>} : vector<16x32xbf16>, vector<32x128xbf16>, vector<16x128xf32> -> vector<16x128xf32>
    %c0_6 = arith.constant 0 : index
    %c0_7 = arith.constant 0 : index
    %6 = vector.load %arg3[%c0_6, %c0_7] : memref<1x128xf32, #tpu.memory_space<vmem>>, vector<1x128xf32>
    %7 = vector.broadcast %6 : vector<1x128xf32> to vector<16x128xf32>
    %8 = arith.addf %5, %7 : vector<16x128xf32>
    %cst_8 = arith.constant 0.000000e+00 : f32
    %9 = vector.broadcast %cst_8 : f32 to vector<16x128xf32>
    %10 = arith.maximumf %8, %9 : vector<16x128xf32>
    %11 = arith.truncf %10 : vector<16x128xf32> to vector<16x128xbf16>
    %cst_9 = arith.constant dense<0.000000e+00> : vector<16x128xf32>
    %12 = tpu.matmul %0, %11, %cst_9 {dimension_numbers = #tpu.dot_dimension_numbers<[1], [0], [0], [1], [0, 0, 1, 1], [], []>} : vector<16x16xbf16>, vector<16x128xbf16>, vector<16x128xf32> -> vector<16x128xf32>
    %13 = arith.truncf %12 : vector<16x128xf32> to vector<16x128xbf16>
    %c0_10 = arith.constant 0 : index
    %c0_11 = arith.constant 0 : index
    %14 = vector.load %arg4[%c0_10, %c0_11] : memref<128x256xbf16, #tpu.memory_space<vmem>>, vector<128x256xbf16>
    %cst_12 = arith.constant dense<0.000000e+00> : vector<16x256xf32>
    %15 = tpu.matmul %13, %14, %cst_12 {dimension_numbers = #tpu.dot_dimension_numbers<[1], [0], [0], [1], [0, 0, 1, 1], [], []>} : vector<16x128xbf16>, vector<128x256xbf16>, vector<16x256xf32> -> vector<16x256xf32>
    %c0_13 = arith.constant 0 : index
    %c0_14 = arith.constant 0 : index
    %16 = vector.load %arg5[%c0_13, %c0_14] : memref<1x256xf32, #tpu.memory_space<vmem>>, vector<1x256xf32>
    %17 = vector.broadcast %16 : vector<1x256xf32> to vector<16x256xf32>
    %18 = arith.addf %15, %17 : vector<16x256xf32>
    %cst_15 = arith.constant 0.000000e+00 : f32
    %19 = vector.broadcast %cst_15 : f32 to vector<16x256xf32>
    %20 = arith.maximumf %18, %19 : vector<16x256xf32>
    %21 = arith.truncf %20 : vector<16x256xf32> to vector<16x256xbf16>
    %c0_16 = arith.constant 0 : index
    %c0_17 = arith.constant 0 : index
    %22 = vector.load %arg6[%c0_16, %c0_17] : memref<256x128xbf16, #tpu.memory_space<vmem>>, vector<256x128xbf16>
    %cst_18 = arith.constant dense<0.000000e+00> : vector<16x128xf32>
    %23 = tpu.matmul %21, %22, %cst_18 {dimension_numbers = #tpu.dot_dimension_numbers<[1], [0], [0], [1], [0, 0, 1, 1], [], []>} : vector<16x256xbf16>, vector<256x128xbf16>, vector<16x128xf32> -> vector<16x128xf32>
    %24 = arith.truncf %23 : vector<16x128xf32> to vector<16x128xbf16>
    %cst_19 = arith.constant dense<0.000000e+00> : vector<16x128xf32>
    %25 = tpu.matmul %0, %24, %cst_19 {dimension_numbers = #tpu.dot_dimension_numbers<[1], [0], [0], [1], [0, 0, 1, 1], [], []>} : vector<16x16xbf16>, vector<16x128xbf16>, vector<16x128xf32> -> vector<16x128xf32>
    %c0_20 = arith.constant 0 : index
    %c0_21 = arith.constant 0 : index
    %26 = vector.load %arg7[%c0_20, %c0_21] : memref<1x128xf32, #tpu.memory_space<vmem>>, vector<1x128xf32>
    %27 = vector.broadcast %26 : vector<1x128xf32> to vector<16x128xf32>
    %28 = arith.addf %25, %27 : vector<16x128xf32>
    %cst_22 = arith.constant 0.000000e+00 : f32
    %29 = vector.broadcast %cst_22 : f32 to vector<16x128xf32>
    %30 = arith.maximumf %28, %29 : vector<16x128xf32>
    %31 = arith.truncf %30 : vector<16x128xf32> to vector<16x128xbf16>
    %c0_23 = arith.constant 0 : index
    %c0_24 = arith.constant 0 : index
    %32 = vector.load %arg8[%c0_23, %c0_24] : memref<128x128xbf16, #tpu.memory_space<vmem>>, vector<128x128xbf16>
    %cst_25 = arith.constant dense<0.000000e+00> : vector<16x128xf32>
    %33 = tpu.matmul %31, %32, %cst_25 {dimension_numbers = #tpu.dot_dimension_numbers<[1], [0], [0], [1], [0, 0, 1, 1], [], []>} : vector<16x128xbf16>, vector<128x128xbf16>, vector<16x128xf32> -> vector<16x128xf32>
    %34 = arith.truncf %33 : vector<16x128xf32> to vector<16x128xbf16>
    %cst_26 = arith.constant dense<0.000000e+00> : vector<16x128xf32>
    %35 = tpu.matmul %0, %34, %cst_26 {dimension_numbers = #tpu.dot_dimension_numbers<[1], [0], [0], [1], [0, 0, 1, 1], [], []>} : vector<16x16xbf16>, vector<16x128xbf16>, vector<16x128xf32> -> vector<16x128xf32>
    %c0_27 = arith.constant 0 : index
    %c0_28 = arith.constant 0 : index
    %36 = vector.load %arg9[%c0_27, %c0_28] : memref<1x128xf32, #tpu.memory_space<vmem>>, vector<1x128xf32>
    %37 = vector.broadcast %36 : vector<1x128xf32> to vector<16x128xf32>
    %38 = arith.addf %35, %37 : vector<16x128xf32>
    %39 = tpu.iota {dimensions = array<i32: 1>} : vector<16x128xi32>
    %c4_i32 = arith.constant 4 : i32
    %40 = vector.broadcast %c4_i32 : i32 to vector<16x128xi32>
    %41 = arith.cmpi slt, %39, %40 : vector<16x128xi32>
    %cst_29 = arith.constant 0xFF800000 : f32
    %42 = vector.broadcast %cst_29 : f32 to vector<16x128xf32>
    %43 = arith.select %41, %38, %42 : vector<16x128xi1>, vector<16x128xf32>
    %cst_30 = arith.constant dense<0xFF800000> : vector<16xf32>
    %44 = vector.multi_reduction <maximumf>, %43, %cst_30 [1] : vector<16x128xf32> to vector<16xf32>
    %45 = vector.shape_cast %44 : vector<16xf32> to vector<16x1xf32>
    %46 = vector.broadcast %45 : vector<16x1xf32> to vector<16x128xf32>
    %47 = arith.subf %43, %46 : vector<16x128xf32>
    %48 = math.exp %47 : vector<16x128xf32>
    %cst_31 = arith.constant dense<0.000000e+00> : vector<16xf32>
    %49 = vector.multi_reduction <add>, %48, %cst_31 [1] : vector<16x128xf32> to vector<16xf32>
    %50 = vector.shape_cast %49 : vector<16xf32> to vector<16x1xf32>
    %51 = math.log %50 : vector<16x1xf32>
    %52 = vector.broadcast %51 : vector<16x1xf32> to vector<16x128xf32>
    %53 = arith.subf %47, %52 : vector<16x128xf32>
    %c0_32 = arith.constant 0 : index
    %c0_33 = arith.constant 0 : index
    %54 = vector.load %arg10[%c0_32, %c0_33] : memref<16x128xf32, #tpu.memory_space<vmem>>, vector<16x128xf32>
    tpu.vector_store %arg10[%c0_32, %c0_33], %53 {strides = array<i32>} : memref<16x128xf32, #tpu.memory_space<vmem>>, vector<16x128xf32>,
    return
  }
}

</mosaic_0001>

<llo_original>
// kernel: gcn_forward.1
$region0: #{gcn_forward.1}
  #allocation0 [shape = 'u32[]', space=smem, size = 0x4, offset = 0x4, fixed_abs, tag = 'smem constant byte address 0x4 - core index']
  #allocation1 [shape = 'u32[144,128]{1,0:T(1,128)}', space=vmem, size = 0x12000, scoped, tag = 'internal scratch']
  %s0 = inlined_call_operand.vmem [shape: bf16[16,16], index: 0, kind: input, shape index: {}]
  %s1 = inlined_call_operand.vmem [shape: bf16[16,32], index: 1, kind: input, shape index: {}]
  %s2 = inlined_call_operand.vmem [shape: bf16[32,128], index: 2, kind: input, shape index: {}]
  %s3 = inlined_call_operand.vmem [shape: f32[1,128], index: 3, kind: input, shape index: {}]
  %s4 = inlined_call_operand.vmem [shape: bf16[128,256], index: 4, kind: input, shape index: {}]
  %s5 = inlined_call_operand.vmem [shape: f32[1,256], index: 5, kind: input, shape index: {}]
  %s6 = inlined_call_operand.vmem [shape: bf16[256,128], index: 6, kind: input, shape index: {}]
  %s7 = inlined_call_operand.vmem [shape: f32[1,128], index: 7, kind: input, shape index: {}]
  %s8 = inlined_call_operand.vmem [shape: bf16[128,128], index: 8, kind: input, shape index: {}]
  %s9 = inlined_call_operand.vmem [shape: f32[1,128], index: 9, kind: input, shape index: {}]
  %s10 = inlined_call_operand.vmem [shape: f32[16,128], index: 10, kind: output, shape index: {}]
  %s11 = sld [smem:[#allocation0]]
  $region50: #{gcn_forward.1} parent=0
    _
  %s13 = ssub.s32 1, %s11
  %s14 = scalar_select 0, %s13, %s11
  // Predicated region
  $region2: #{gcn_forward.1} parent=0 // pred_check
    _
  $region3: #{gcn_forward.1} parent=0 // pred_check_branch
    %16 = sbr.rel (0) target = $region5
  $region4: #{gcn_forward.1} parent=0 // pred_region
    _
  $region5: #{gcn_forward.1} parent=0 // pred_fallthru
    _
  // Predicated region
  $region6: #{gcn_forward.1} parent=0 // pred_check
    _
  $region7: #{gcn_forward.1} parent=0 // pred_check_branch
    %18 = sbr.rel (0) target = $region9
  $region8: #{gcn_forward.1} parent=0 // pred_region
    _
  $region9: #{gcn_forward.1} parent=0 // pred_fallthru
    _
  // Predicated region
  $region10: #{gcn_forward.1} parent=0 // pred_check
    _
  $region11: #{gcn_forward.1} parent=0 // pred_check_branch
    %20 = sbr.rel (0) target = $region13
  $region12: #{gcn_forward.1} parent=0 // pred_region
    _
  $region13: #{gcn_forward.1} parent=0 // pred_fallthru
    _
  // Predicated region
  $region14: #{gcn_forward.1} parent=0 // pred_check
    _
  $region15: #{gcn_forward.1} parent=0 // pred_check_branch
    %22 = sbr.rel (0) target = $region17
  $region16: #{gcn_forward.1} parent=0 // pred_region
    _
  $region17: #{gcn_forward.1} parent=0 // pred_fallthru
    _
  // Predicated region
  $region18: #{gcn_forward.1} parent=0 // pred_check
    _
  $region19: #{gcn_forward.1} parent=0 // pred_check_branch
    %24 = sbr.rel (0) target = $region21
  $region20: #{gcn_forward.1} parent=0 // pred_region
    _
  $region21: #{gcn_forward.1} parent=0 // pred_fallthru
    _
  // Predicated region
  $region22: #{gcn_forward.1} parent=0 // pred_check
    _
  $region23: #{gcn_forward.1} parent=0 // pred_check_branch
    %26 = sbr.rel (0) target = $region25
  $region24: #{gcn_forward.1} parent=0 // pred_region
    _
  $region25: #{gcn_forward.1} parent=0 // pred_fallthru
    _
  // Predicated region
  $region26: #{gcn_forward.1} parent=0 // pred_check
    _
  $region27: #{gcn_forward.1} parent=0 // pred_check_branch
    %28 = sbr.rel (0) target = $region29
  $region28: #{gcn_forward.1} parent=0 // pred_region
    _
  $region29: #{gcn_forward.1} parent=0 // pred_fallthru
    _
  // Predicated region
  $region30: #{gcn_forward.1} parent=0 // pred_check
    _
  $region31: #{gcn_forward.1} parent=0 // pred_check_branch
    %30 = sbr.rel (0) target = $region33
  $region32: #{gcn_forward.1} parent=0 // pred_region
    _
  $region33: #{gcn_forward.1} parent=0 // pred_fallthru
    _
  // Predicated region
  $region34: #{gcn_forward.1} parent=0 // pred_check
    _
  $region35: #{gcn_forward.1} parent=0 // pred_check_branch
    %32 = sbr.rel (0) target = $region37
  $region36: #{gcn_forward.1} parent=0 // pred_region
    _
  $region37: #{gcn_forward.1} parent=0 // pred_fallthru
    _
  // Predicated region
  $region38: #{gcn_forward.1} parent=0 // pred_check
    _
  $region39: #{gcn_forward.1} parent=0 // pred_check_branch
    %34 = sbr.rel (0) target = $region41
  $region40: #{gcn_forward.1} parent=0 // pred_region
    _
  $region41: #{gcn_forward.1} parent=0 // pred_fallthru
    _
  %v36 = vld [vmem:[%s0] sm:$0xf]
  %v37 = vld [vmem:[%s0 + $0x4] sm:$0xf]
  %v38 = vld [vmem:[%s1] sm:$0xf]
  %v39 = vld [vmem:[%s1 + $0x4] sm:$0xf]
  %v42 = vunpack.c.l.b16 %v36
  %v43 = vunpack.c.l.b16 %v37
  %v44 = vpack.c.b16 %v43, %v42
  %v47 = vunpack.c.l.b16 %v38
  %v48 = vunpack.c.l.b16 %v39
  %v49 = vpack.c.b16 %v48, %v47
  %vm51 = vcmask 130048
  %v53 = vsel %vm51, %v44, 0
  %55 = vmatprep.subr.bf16.mxu0 0
  %56 = vmatpush1.bf16.msra.mxu0 0
  %57 = vmatprep.subr.bf16.mxu0 0
  %58 = vmatpush1.bf16.msra.mxu0 0
  %59 = vmatprep.subr.bf16.mxu0 0
  %60 = vmatpush1.bf16.msra.mxu0 0
  %61 = vmatprep.subr.bf16.mxu0 0
  %62 = vmatpush1.bf16.msra.mxu0 0
  %63 = vmatprep.subr.bf16.mxu0 0
  %64 = vmatpush1.bf16.msra.mxu0 0
  %65 = vmatprep.subr.bf16.mxu0 0
  %66 = vmatpush1.bf16.msra.mxu0 0
  %67 = vmatprep.subr.bf16.mxu0 0
  %68 = vmatpush1.bf16.msra.mxu0 0
  %69 = vmatprep.subr.bf16.mxu0 0
  %70 = vmatpush1.bf16.msra.mxu0 %v49
  %71 = vmatprep.subr.bf16.mxu0 0
  %72 = vmatpush2.bf16.msra.mxu0 0
  %73 = vmatprep.subr.bf16.mxu0 0
  %74 = vmatpush2.bf16.msra.mxu0 0
  %75 = vmatprep.subr.bf16.mxu0 0
  %76 = vmatpush2.bf16.msra.mxu0 0
  %77 = vmatprep.subr.bf16.mxu0 0
  %78 = vmatpush2.bf16.msra.mxu0 0
  %79 = vmatprep.subr.bf16.mxu0 0
  %80 = vmatpush2.bf16.msra.mxu0 0
  %81 = vmatprep.subr.bf16.mxu0 0
  %82 = vmatpush2.bf16.msra.mxu0 0
  %83 = vmatprep.subr.bf16.mxu0 0
  %84 = vmatpush2.bf16.msra.mxu0 0
  %85 = vmatprep.subr.bf16.mxu0 0
  %86 = vmatpush2.bf16.msra.mxu0 0
  %87 = vmatprep.mubr.bf16.mxu0 0
  %88 = vmatmul.mubr.bf16.gmra.mxu0 %v53
  %v89 = vpop.f32.mrf.mxu0
  %v90 = vadd.f32 0.0, %v89
  %v91 = vpop.f32.mrf.mxu0
  %v92 = vpop.f32.mrf.mxu0
  %v93 = vadd.f32 0.0, %v92
  %v94 = vpop.f32.mrf.mxu0
  %95 = vdwg.mxu0
  %v96 = vpack.c.bf16 %v93, %v90
  %v97 = vld [vmem:[%s2] sm:$0xf]
  %v98 = vld [vmem:[%s2 + $0x4] sm:$0xf]
  %v99 = vld [vmem:[%s2 + $0x8] sm:$0xf]
  %v100 = vld [vmem:[%s2 + $0xc] sm:$0xf]
  %v101 = vld [vmem:[%s3] sm:$0x1]
  %v103 = vlaneseq
  %v104 = vshrl.u32 %v103, 7
  %v105 = vsub.s32 0, %v104
  %v106 = vrot.slane %v101, %v105
  %v112 = vunpack.c.l.b16 %v97
  %v113 = vunpack.c.l.b16 %v98
  %v114 = vunpack.c.l.b16 %v99
  %v115 = vunpack.c.l.b16 %v100
  %v116 = vpack.c.b16 %v113, %v112
  %v117 = vpack.c.b16 %v115, %v114
  %vm120 = vcmask 261120
  %v122 = vsel %vm120, %v96, 0
  %124 = vmatprep.subr.bf16.mxu0 0
  %125 = vmatpush1.bf16.msra.mxu0 0
  %126 = vmatprep.subr.bf16.mxu0 0
  %127 = vmatpush1.bf16.msra.mxu0 0
  %128 = vmatprep.subr.bf16.mxu0 0
  %129 = vmatpush1.bf16.msra.mxu0 0
  %130 = vmatprep.subr.bf16.mxu0 0
  %131 = vmatpush1.bf16.msra.mxu0 0
  %132 = vmatprep.subr.bf16.mxu0 0
  %133 = vmatpush1.bf16.msra.mxu0 0
  %134 = vmatprep.subr.bf16.mxu0 0
  %135 = vmatpush1.bf16.msra.mxu0 0
  %136 = vmatprep.subr.bf16.mxu0 0
  %137 = vmatpush1.bf16.msra.mxu0 %v117
  %138 = vmatprep.subr.bf16.mxu0 0
  %139 = vmatpush1.bf16.msra.mxu0 %v116
  %140 = vmatprep.subr.bf16.mxu0 0
  %141 = vmatpush2.bf16.msra.mxu0 0
  %142 = vmatprep.subr.bf16.mxu0 0
  %143 = vmatpush2.bf16.msra.mxu0 0
  %144 = vmatprep.subr.bf16.mxu0 0
  %145 = vmatpush2.bf16.msra.mxu0 0
  %146 = vmatprep.subr.bf16.mxu0 0
  %147 = vmatpush2.bf16.msra.mxu0 0
  %148 = vmatprep.subr.bf16.mxu0 0
  %149 = vmatpush2.bf16.msra.mxu0 0
  %150 = vmatprep.subr.bf16.mxu0 0
  %151 = vmatpush2.bf16.msra.mxu0 0
  %152 = vmatprep.subr.bf16.mxu0 0
  %153 = vmatpush2.bf16.msra.mxu0 0
  %154 = vmatprep.subr.bf16.mxu0 0
  %155 = vmatpush2.bf16.msra.mxu0 0
  %156 = vmatprep.mubr.bf16.mxu0 0
  %157 = vmatmul.mubr.bf16.gmra.mxu0 %v122
  %v158 = vpop.f32.mrf.mxu0
  %v159 = vadd.f32 %v106, %v158
  %v160 = vpop.f32.mrf.mxu0
  %v161 = vpop.f32.mrf.mxu0
  %v162 = vadd.f32 %v106, %v161
  %v163 = vpop.f32.mrf.mxu0
  %164 = vdwg.mxu0
  %v165 = vmax.f32 %v159, 0.0
  %v166 = vmax.f32 %v162, 0.0
  %v167 = vpack.c.bf16 %v166, %v165
  %168 = vmatprep.subr.bf16.mxu0 0
  %169 = vmatpush1.bf16.msra.mxu0 0
  %170 = vmatprep.subr.bf16.mxu0 0
  %171 = vmatpush1.bf16.msra.mxu0 0
  %172 = vmatprep.subr.bf16.mxu0 0
  %173 = vmatpush1.bf16.msra.mxu0 0
  %174 = vmatprep.subr.bf16.mxu0 0
  %175 = vmatpush1.bf16.msra.mxu0 0
  %176 = vmatprep.subr.bf16.mxu0 0
  %177 = vmatpush1.bf16.msra.mxu0 0
  %178 = vmatprep.subr.bf16.mxu0 0
  %179 = vmatpush1.bf16.msra.mxu0 0
  %180 = vmatprep.subr.bf16.mxu0 0
  %181 = vmatpush1.bf16.msra.mxu0 0
  %182 = vmatprep.subr.bf16.mxu0 0
  %183 = vmatpush1.bf16.msra.mxu0 %v167
  %184 = vmatprep.subr.bf16.mxu0 0
  %185 = vmatpush2.bf16.msra.mxu0 0
  %186 = vmatprep.subr.bf16.mxu0 0
  %187 = vmatpush2.bf16.msra.mxu0 0
  %188 = vmatprep.subr.bf16.mxu0 0
  %189 = vmatpush2.bf16.msra.mxu0 0
  %190 = vmatprep.subr.bf16.mxu0 0
  %191 = vmatpush2.bf16.msra.mxu0 0
  %192 = vmatprep.subr.bf16.mxu0 0
  %193 = vmatpush2.bf16.msra.mxu0 0
  %194 = vmatprep.subr.bf16.mxu0 0
  %195 = vmatpush2.bf16.msra.mxu0 0
  %196 = vmatprep.subr.bf16.mxu0 0
  %197 = vmatpush2.bf16.msra.mxu0 0
  %198 = vmatprep.subr.bf16.mxu0 0
  %199 = vmatpush2.bf16.msra.mxu0 0
  %200 = vmatprep.mubr.bf16.mxu0 0
  %201 = vmatmul.mubr.bf16.gmra.mxu0 %v53
  %v202 = vpop.f32.mrf.mxu0
  %v203 = vadd.f32 0.0, %v202
  %v204 = vpop.f32.mrf.mxu0
  %v205 = vpop.f32.mrf.mxu0
  %v206 = vadd.f32 0.0, %v205
  %v207 = vpop.f32.mrf.mxu0
  %208 = vdwg.mxu0
  %v209 = vpack.c.bf16 %v206, %v203
  %v210 = vld [vmem:[%s4] sm:$0xff]
  %v211 = vld [vmem:[%s4 + $0x8] sm:$0xff]
  %v212 = vld [vmem:[%s4 + $0x10] sm:$0xff]
  %v213 = vld [vmem:[%s4 + $0x18] sm:$0xff]
  %v214 = vld [vmem:[%s4 + $0x20] sm:$0xff]
  %v215 = vld [vmem:[%s4 + $0x28] sm:$0xff]
  %v216 = vld [vmem:[%s4 + $0x30] sm:$0xff]
  %v217 = vld [vmem:[%s4 + $0x38] sm:$0xff]
  %v218 = vld [vmem:[%s4 + $0x40] sm:$0xff]
  %v219 = vld [vmem:[%s4 + $0x48] sm:$0xff]
  %v220 = vld [vmem:[%s4 + $0x50] sm:$0xff]
  %v221 = vld [vmem:[%s4 + $0x58] sm:$0xff]
  %v222 = vld [vmem:[%s4 + $0x60] sm:$0xff]
  %v223 = vld [vmem:[%s4 + $0x68] sm:$0xff]
  %v224 = vld [vmem:[%s4 + $0x70] sm:$0xff]
  %v225 = vld [vmem:[%s4 + $0x78] sm:$0xff]
  %v226 = vld [vmem:[%s5] sm:$0x3]
  %v228 = vlaneseq
  %v229 = vshrl.u32 %v228, 7
  %v230 = vsub.s32 0, %v229
  %v231 = vrot.slane %v226, %v230
  %v232 = vlaneseq
  %v233 = vshrl.u32 %v232, 7
  %v234 = vsub.s32 1, %v233
  %v235 = vrot.slane %v226, %v234
  %v254 = vunpack.c.l.b16 %v210
  %v255 = vunpack.c.h.b16 %v210
  %v256 = vunpack.c.l.b16 %v211
  %v257 = vunpack.c.h.b16 %v211
  %v258 = vunpack.c.l.b16 %v212
  %v259 = vunpack.c.h.b16 %v212
  %v260 = vunpack.c.l.b16 %v213
  %v261 = vunpack.c.h.b16 %v213
  %v262 = vunpack.c.l.b16 %v214
  %v263 = vunpack.c.h.b16 %v214
  %v264 = vunpack.c.l.b16 %v215
  %v265 = vunpack.c.h.b16 %v215
  %v266 = vunpack.c.l.b16 %v216
  %v267 = vunpack.c.h.b16 %v216
  %v268 = vunpack.c.l.b16 %v217
  %v269 = vunpack.c.h.b16 %v217
  %v270 = vunpack.c.l.b16 %v218
  %v271 = vunpack.c.h.b16 %v218
  %v272 = vunpack.c.l.b16 %v219
  %v273 = vunpack.c.h.b16 %v219
  %v274 = vunpack.c.l.b16 %v220
  %v275 = vunpack.c.h.b16 %v220
  %v276 = vunpack.c.l.b16 %v221
  %v277 = vunpack.c.h.b16 %v221
  %v278 = vunpack.c.l.b16 %v222
  %v279 = vunpack.c.h.b16 %v222
  %v280 = vunpack.c.l.b16 %v223
  %v281 = vunpack.c.h.b16 %v223
  %v282 = vunpack.c.l.b16 %v224
  %v283 = vunpack.c.h.b16 %v224
  %v284 = vunpack.c.l.b16 %v225
  %v285 = vunpack.c.h.b16 %v225
  %v286 = vpack.c.b16 %v256, %v254
  %v287 = vpack.c.b16 %v257, %v255
  %v288 = vpack.c.b16 %v260, %v258
  %v289 = vpack.c.b16 %v261, %v259
  %v290 = vpack.c.b16 %v264, %v262
  %v291 = vpack.c.b16 %v265, %v263
  %v292 = vpack.c.b16 %v268, %v266
  %v293 = vpack.c.b16 %v269, %v267
  %v294 = vpack.c.b16 %v272, %v270
  %v295 = vpack.c.b16 %v273, %v271
  %v296 = vpack.c.b16 %v276, %v274
  %v297 = vpack.c.b16 %v277, %v275
  %v298 = vpack.c.b16 %v280, %v278
  %v299 = vpack.c.b16 %v281, %v279
  %v300 = vpack.c.b16 %v284, %v282
  %v301 = vpack.c.b16 %v285, %v283
  %318 = vmatprep.subr.bf16.mxu0 %v301
  %319 = vmatpush1.bf16.msra.mxu0 %v300
  %320 = vmatprep.subr.bf16.mxu0 %v299
  %321 = vmatpush1.bf16.msra.mxu0 %v298
  %322 = vmatprep.subr.bf16.mxu0 %v297
  %323 = vmatpush1.bf16.msra.mxu0 %v296
  %324 = vmatprep.subr.bf16.mxu0 %v295
  %325 = vmatpush1.bf16.msra.mxu0 %v294
  %326 = vmatprep.subr.bf16.mxu0 %v293
  %327 = vmatpush1.bf16.msra.mxu0 %v292
  %328 = vmatprep.subr.bf16.mxu0 %v291
  %329 = vmatpush1.bf16.msra.mxu0 %v290
  %330 = vmatprep.subr.bf16.mxu0 %v289
  %331 = vmatpush1.bf16.msra.mxu0 %v288
  %332 = vmatprep.subr.bf16.mxu0 %v287
  %333 = vmatpush1.bf16.msra.mxu0 %v286
  %334 = vmatprep.subr.bf16.mxu0 0
  %335 = vmatpush2.bf16.msra.mxu0 0
  %336 = vmatprep.subr.bf16.mxu0 0
  %337 = vmatpush2.bf16.msra.mxu0 0
  %338 = vmatprep.subr.bf16.mxu0 0
  %339 = vmatpush2.bf16.msra.mxu0 0
  %340 = vmatprep.subr.bf16.mxu0 0
  %341 = vmatpush2.bf16.msra.mxu0 0
  %342 = vmatprep.subr.bf16.mxu0 0
  %343 = vmatpush2.bf16.msra.mxu0 0
  %344 = vmatprep.subr.bf16.mxu0 0
  %345 = vmatpush2.bf16.msra.mxu0 0
  %346 = vmatprep.subr.bf16.mxu0 0
  %347 = vmatpush2.bf16.msra.mxu0 0
  %348 = vmatprep.subr.bf16.mxu0 0
  %349 = vmatpush2.bf16.msra.mxu0 0
  %350 = vmatprep.mubr.bf16.mxu0 0
  %351 = vmatmul.mubr.bf16.gmra.mxu0 %v209
  %v352 = vpop.f32.mrf.mxu0
  %v353 = vadd.f32 %v231, %v352
  %v354 = vpop.f32.mrf.mxu0
  %v355 = vadd.f32 %v235, %v354
  %v356 = vpop.f32.mrf.mxu0
  %v357 = vadd.f32 %v231, %v356
  %v358 = vpop.f32.mrf.mxu0
  %v359 = vadd.f32 %v235, %v358
  %360 = vdwg.mxu0
  %v361 = vmax.f32 %v353, 0.0
  %v362 = vmax.f32 %v355, 0.0
  %v363 = vmax.f32 %v357, 0.0
  %v364 = vmax.f32 %v359, 0.0
  %v365 = vpack.c.bf16 %v363, %v361
  %v366 = vpack.c.bf16 %v364, %v362
  %v367 = vld [vmem:[%s6] sm:$0xf]
  %v368 = vld [vmem:[%s6 + $0x4] sm:$0xf]
  %v369 = vld [vmem:[%s6 + $0x8] sm:$0xf]
  %v370 = vld [vmem:[%s6 + $0xc] sm:$0xf]
  %v371 = vld [vmem:[%s6 + $0x10] sm:$0xf]
  %v372 = vld [vmem:[%s6 + $0x14] sm:$0xf]
  %v373 = vld [vmem:[%s6 + $0x18] sm:$0xf]
  %v374 = vld [vmem:[%s6 + $0x1c] sm:$0xf]
  %v375 = vld [vmem:[%s6 + $0x20] sm:$0xf]
  %v376 = vld [vmem:[%s6 + $0x24] sm:$0xf]
  %v377 = vld [vmem:[%s6 + $0x28] sm:$0xf]
  %v378 = vld [vmem:[%s6 + $0x2c] sm:$0xf]
  %v379 = vld [vmem:[%s6 + $0x30] sm:$0xf]
  %v380 = vld [vmem:[%s6 + $0x34] sm:$0xf]
  %v381 = vld [vmem:[%s6 + $0x38] sm:$0xf]
  %v382 = vld [vmem:[%s6 + $0x3c] sm:$0xf]
  %v383 = vld [vmem:[%s6 + $0x40] sm:$0xf]
  %v384 = vld [vmem:[%s6 + $0x44] sm:$0xf]
  %v385 = vld [vmem:[%s6 + $0x48] sm:$0xf]
  %v386 = vld [vmem:[%s6 + $0x4c] sm:$0xf]
  %v387 = vld [vmem:[%s6 + $0x50] sm:$0xf]
  %v388 = vld [vmem:[%s6 + $0x54] sm:$0xf]
  %v389 = vld [vmem:[%s6 + $0x58] sm:$0xf]
  %v390 = vld [vmem:[%s6 + $0x5c] sm:$0xf]
  %v391 = vld [vmem:[%s6 + $0x60] sm:$0xf]
  %v392 = vld [vmem:[%s6 + $0x64] sm:$0xf]
  %v393 = vld [vmem:[%s6 + $0x68] sm:$0xf]
  %v394 = vld [vmem:[%s6 + $0x6c] sm:$0xf]
  %v395 = vld [vmem:[%s6 + $0x70] sm:$0xf]
  %v396 = vld [vmem:[%s6 + $0x74] sm:$0xf]
  %v397 = vld [vmem:[%s6 + $0x78] sm:$0xf]
  %v398 = vld [vmem:[%s6 + $0x7c] sm:$0xf]
  %v431 = vunpack.c.l.b16 %v367
  %v432 = vunpack.c.l.b16 %v368
  %v433 = vunpack.c.l.b16 %v369
  %v434 = vunpack.c.l.b16 %v370
  %v435 = vunpack.c.l.b16 %v371
  %v436 = vunpack.c.l.b16 %v372
  %v437 = vunpack.c.l.b16 %v373
  %v438 = vunpack.c.l.b16 %v374
  %v439 = vunpack.c.l.b16 %v375
  %v440 = vunpack.c.l.b16 %v376
  %v441 = vunpack.c.l.b16 %v377
  %v442 = vunpack.c.l.b16 %v378
  %v443 = vunpack.c.l.b16 %v379
  %v444 = vunpack.c.l.b16 %v380
  %v445 = vunpack.c.l.b16 %v381
  %v446 = vunpack.c.l.b16 %v382
  %v447 = vunpack.c.l.b16 %v383
  %v448 = vunpack.c.l.b16 %v384
  %v449 = vunpack.c.l.b16 %v385
  %v450 = vunpack.c.l.b16 %v386
  %v451 = vunpack.c.l.b16 %v387
  %v452 = vunpack.c.l.b16 %v388
  %v453 = vunpack.c.l.b16 %v389
  %v454 = vunpack.c.l.b16 %v390
  %v455 = vunpack.c.l.b16 %v391
  %v456 = vunpack.c.l.b16 %v392
  %v457 = vunpack.c.l.b16 %v393
  %v458 = vunpack.c.l.b16 %v394
  %v459 = vunpack.c.l.b16 %v395
  %v460 = vunpack.c.l.b16 %v396
  %v461 = vunpack.c.l.b16 %v397
  %v462 = vunpack.c.l.b16 %v398
  %v463 = vpack.c.b16 %v432, %v431
  %v464 = vpack.c.b16 %v434, %v433
  %v465 = vpack.c.b16 %v436, %v435
  %v466 = vpack.c.b16 %v438, %v437
  %v467 = vpack.c.b16 %v440, %v439
  %v468 = vpack.c.b16 %v442, %v441
  %v469 = vpack.c.b16 %v444, %v443
  %v470 = vpack.c.b16 %v446, %v445
  %v471 = vpack.c.b16 %v448, %v447
  %v472 = vpack.c.b16 %v450, %v449
  %v473 = vpack.c.b16 %v452, %v451
  %v474 = vpack.c.b16 %v454, %v453
  %v475 = vpack.c.b16 %v456, %v455
  %v476 = vpack.c.b16 %v458, %v457
  %v477 = vpack.c.b16 %v460, %v459
  %v478 = vpack.c.b16 %v462, %v461
  %495 = vmatprep.subr.bf16.mxu0 0
  %496 = vmatpush1.bf16.msra.mxu0 %v470
  %497 = vmatprep.subr.bf16.mxu0 0
  %498 = vmatpush1.bf16.msra.mxu0 %v469
  %499 = vmatprep.subr.bf16.mxu0 0
  %500 = vmatpush1.bf16.msra.mxu0 %v468
  %501 = vmatprep.subr.bf16.mxu0 0
  %502 = vmatpush1.bf16.msra.mxu0 %v467
  %503 = vmatprep.subr.bf16.mxu0 0
  %504 = vmatpush1.bf16.msra.mxu0 %v466
  %505 = vmatprep.subr.bf16.mxu0 0
  %506 = vmatpush1.bf16.msra.mxu0 %v465
  %507 = vmatprep.subr.bf16.mxu0 0
  %508 = vmatpush1.bf16.msra.mxu0 %v464
  %509 = vmatprep.subr.bf16.mxu0 0
  %510 = vmatpush1.bf16.msra.mxu0 %v463
  %511 = vmatprep.subr.bf16.mxu0 0
  %512 = vmatpush2.bf16.msra.mxu0 %v478
  %513 = vmatprep.subr.bf16.mxu0 0
  %514 = vmatpush2.bf16.msra.mxu0 %v477
  %515 = vmatprep.subr.bf16.mxu0 0
  %516 = vmatpush2.bf16.msra.mxu0 %v476
  %517 = vmatprep.subr.bf16.mxu0 0
  %518 = vmatpush2.bf16.msra.mxu0 %v475
  %519 = vmatprep.subr.bf16.mxu0 0
  %520 = vmatpush2.bf16.msra.mxu0 %v474
  %521 = vmatprep.subr.bf16.mxu0 0
  %522 = vmatpush2.bf16.msra.mxu0 %v473
  %523 = vmatprep.subr.bf16.mxu0 0
  %524 = vmatpush2.bf16.msra.mxu0 %v472
  %525 = vmatprep.subr.bf16.mxu0 0
  %526 = vmatpush2.bf16.msra.mxu0 %v471
  %527 = vmatprep.mubr.bf16.mxu0 %v366
  %528 = vmatmul.mubr.bf16.gmra.mxu0 %v365
  %v529 = vpop.f32.mrf.mxu0
  %v530 = vadd.f32 0.0, %v529
  %v531 = vpop.f32.mrf.mxu0
  %v532 = vpop.f32.mrf.mxu0
  %v533 = vadd.f32 0.0, %v532
  %v534 = vpop.f32.mrf.mxu0
  %535 = vdwg.mxu0
  %v536 = vpack.c.bf16 %v533, %v530
  %v537 = vld [vmem:[%s7] sm:$0x1]
  %v539 = vlaneseq
  %v540 = vshrl.u32 %v539, 7
  %v541 = vsub.s32 0, %v540
  %v542 = vrot.slane %v537, %v541
  %544 = vmatprep.subr.bf16.mxu0 0
  %545 = vmatpush1.bf16.msra.mxu0 0
  %546 = vmatprep.subr.bf16.mxu0 0
  %547 = vmatpush1.bf16.msra.mxu0 0
  %548 = vmatprep.subr.bf16.mxu0 0
  %549 = vmatpush1.bf16.msra.mxu0 0
  %550 = vmatprep.subr.bf16.mxu0 0
  %551 = vmatpush1.bf16.msra.mxu0 0
  %552 = vmatprep.subr.bf16.mxu0 0
  %553 = vmatpush1.bf16.msra.mxu0 0
  %554 = vmatprep.subr.bf16.mxu0 0
  %555 = vmatpush1.bf16.msra.mxu0 0
  %556 = vmatprep.subr.bf16.mxu0 0
  %557 = vmatpush1.bf16.msra.mxu0 0
  %558 = vmatprep.subr.bf16.mxu0 0
  %559 = vmatpush1.bf16.msra.mxu0 %v536
  %560 = vmatprep.subr.bf16.mxu0 0
  %561 = vmatpush2.bf16.msra.mxu0 0
  %562 = vmatprep.subr.bf16.mxu0 0
  %563 = vmatpush2.bf16.msra.mxu0 0
  %564 = vmatprep.subr.bf16.mxu0 0
  %565 = vmatpush2.bf16.msra.mxu0 0
  %566 = vmatprep.subr.bf16.mxu0 0
  %567 = vmatpush2.bf16.msra.mxu0 0
  %568 = vmatprep.subr.bf16.mxu0 0
  %569 = vmatpush2.bf16.msra.mxu0 0
  %570 = vmatprep.subr.bf16.mxu0 0
  %571 = vmatpush2.bf16.msra.mxu0 0
  %572 = vmatprep.subr.bf16.mxu0 0
  %573 = vmatpush2.bf16.msra.mxu0 0
  %574 = vmatprep.subr.bf16.mxu0 0
  %575 = vmatpush2.bf16.msra.mxu0 0
  %576 = vmatprep.mubr.bf16.mxu0 0
  %577 = vmatmul.mubr.bf16.gmra.mxu0 %v53
  %v578 = vpop.f32.mrf.mxu0
  %v579 = vadd.f32 %v542, %v578
  %v580 = vpop.f32.mrf.mxu0
  %v581 = vpop.f32.mrf.mxu0
  %v582 = vadd.f32 %v542, %v581
  %v583 = vpop.f32.mrf.mxu0
  %584 = vdwg.mxu0
  %v585 = vmax.f32 %v579, 0.0
  %v586 = vmax.f32 %v582, 0.0
  %v587 = vpack.c.bf16 %v586, %v585
  %v588 = vld [vmem:[%s8] sm:$0xf]
  %v589 = vld [vmem:[%s8 + $0x4] sm:$0xf]
  %v590 = vld [vmem:[%s8 + $0x8] sm:$0xf]
  %v591 = vld [vmem:[%s8 + $0xc] sm:$0xf]
  %v592 = vld [vmem:[%s8 + $0x10] sm:$0xf]
  %v593 = vld [vmem:[%s8 + $0x14] sm:$0xf]
  %v594 = vld [vmem:[%s8 + $0x18] sm:$0xf]
  %v595 = vld [vmem:[%s8 + $0x1c] sm:$0xf]
  %v596 = vld [vmem:[%s8 + $0x20] sm:$0xf]
  %v597 = vld [vmem:[%s8 + $0x24] sm:$0xf]
  %v598 = vld [vmem:[%s8 + $0x28] sm:$0xf]
  %v599 = vld [vmem:[%s8 + $0x2c] sm:$0xf]
  %v600 = vld [vmem:[%s8 + $0x30] sm:$0xf]
  %v601 = vld [vmem:[%s8 + $0x34] sm:$0xf]
  %v602 = vld [vmem:[%s8 + $0x38] sm:$0xf]
  %v603 = vld [vmem:[%s8 + $0x3c] sm:$0xf]
  %v620 = vunpack.c.l.b16 %v588
  %v621 = vunpack.c.l.b16 %v589
  %v622 = vunpack.c.l.b16 %v590
  %v623 = vunpack.c.l.b16 %v591
  %v624 = vunpack.c.l.b16 %v592
  %v625 = vunpack.c.l.b16 %v593
  %v626 = vunpack.c.l.b16 %v594
  %v627 = vunpack.c.l.b16 %v595
  %v628 = vunpack.c.l.b16 %v596
  %v629 = vunpack.c.l.b16 %v597
  %v630 = vunpack.c.l.b16 %v598
  %v631 = vunpack.c.l.b16 %v599
  %v632 = vunpack.c.l.b16 %v600
  %v633 = vunpack.c.l.b16 %v601
  %v634 = vunpack.c.l.b16 %v602
  %v635 = vunpack.c.l.b16 %v603
  %v636 = vpack.c.b16 %v621, %v620
  %v637 = vpack.c.b16 %v623, %v622
  %v638 = vpack.c.b16 %v625, %v624
  %v639 = vpack.c.b16 %v627, %v626
  %v640 = vpack.c.b16 %v629, %v628
  %v641 = vpack.c.b16 %v631, %v630
  %v642 = vpack.c.b16 %v633, %v632
  %v643 = vpack.c.b16 %v635, %v634
  %652 = vmatprep.subr.bf16.mxu0 0
  %653 = vmatpush1.bf16.msra.mxu0 %v643
  %654 = vmatprep.subr.bf16.mxu0 0
  %655 = vmatpush1.bf16.msra.mxu0 %v642
  %656 = vmatprep.subr.bf16.mxu0 0
  %657 = vmatpush1.bf16.msra.mxu0 %v641
  %658 = vmatprep.subr.bf16.mxu0 0
  %659 = vmatpush1.bf16.msra.mxu0 %v640
  %660 = vmatprep.subr.bf16.mxu0 0
  %661 = vmatpush1.bf16.msra.mxu0 %v639
  %662 = vmatprep.subr.bf16.mxu0 0
  %663 = vmatpush1.bf16.msra.mxu0 %v638
  %664 = vmatprep.subr.bf16.mxu0 0
  %665 = vmatpush1.bf16.msra.mxu0 %v637
  %666 = vmatprep.subr.bf16.mxu0 0
  %667 = vmatpush1.bf16.msra.mxu0 %v636
  %668 = vmatprep.subr.bf16.mxu0 0
  %669 = vmatpush2.bf16.msra.mxu0 0
  %670 = vmatprep.subr.bf16.mxu0 0
  %671 = vmatpush2.bf16.msra.mxu0 0
  %672 = vmatprep.subr.bf16.mxu0 0
  %673 = vmatpush2.bf16.msra.mxu0 0
  %674 = vmatprep.subr.bf16.mxu0 0
  %675 = vmatpush2.bf16.msra.mxu0 0
  %676 = vmatprep.subr.bf16.mxu0 0
  %677 = vmatpush2.bf16.msra.mxu0 0
  %678 = vmatprep.subr.bf16.mxu0 0
  %679 = vmatpush2.bf16.msra.mxu0 0
  %680 = vmatprep.subr.bf16.mxu0 0
  %681 = vmatpush2.bf16.msra.mxu0 0
  %682 = vmatprep.subr.bf16.mxu0 0
  %683 = vmatpush2.bf16.msra.mxu0 0
  %684 = vmatprep.mubr.bf16.mxu0 0
  %685 = vmatmul.mubr.bf16.gmra.mxu0 %v587
  %v686 = vpop.f32.mrf.mxu0
  %v687 = vadd.f32 0.0, %v686
  %v688 = vpop.f32.mrf.mxu0
  %v689 = vpop.f32.mrf.mxu0
  %v690 = vadd.f32 0.0, %v689
  %v691 = vpop.f32.mrf.mxu0
  %692 = vdwg.mxu0
  %v693 = vpack.c.bf16 %v690, %v687
  %v694 = vld [vmem:[%s9] sm:$0x1]
  %v696 = vlaneseq
  %v697 = vshrl.u32 %v696, 7
  %v698 = vsub.s32 0, %v697
  %v699 = vrot.slane %v694, %v698
  %701 = vmatprep.subr.bf16.mxu0 0
  %702 = vmatpush1.bf16.msra.mxu0 0
  %703 = vmatprep.subr.bf16.mxu0 0
  %704 = vmatpush1.bf16.msra.mxu0 0
  %705 = vmatprep.subr.bf16.mxu0 0
  %706 = vmatpush1.bf16.msra.mxu0 0
  %707 = vmatprep.subr.bf16.mxu0 0
  %708 = vmatpush1.bf16.msra.mxu0 0
  %709 = vmatprep.subr.bf16.mxu0 0
  %710 = vmatpush1.bf16.msra.mxu0 0
  %711 = vmatprep.subr.bf16.mxu0 0
  %712 = vmatpush1.bf16.msra.mxu0 0
  %713 = vmatprep.subr.bf16.mxu0 0
  %714 = vmatpush1.bf16.msra.mxu0 0
  %715 = vmatprep.subr.bf16.mxu0 0
  %716 = vmatpush1.bf16.msra.mxu0 %v693
  %717 = vmatprep.subr.bf16.mxu0 0
  %718 = vmatpush2.bf16.msra.mxu0 0
  %719 = vmatprep.subr.bf16.mxu0 0
  %720 = vmatpush2.bf16.msra.mxu0 0
  %721 = vmatprep.subr.bf16.mxu0 0
  %722 = vmatpush2.bf16.msra.mxu0 0
  %723 = vmatprep.subr.bf16.mxu0 0
  %724 = vmatpush2.bf16.msra.mxu0 0
  %725 = vmatprep.subr.bf16.mxu0 0
  %726 = vmatpush2.bf16.msra.mxu0 0
  %727 = vmatprep.subr.bf16.mxu0 0
  %728 = vmatpush2.bf16.msra.mxu0 0
  %729 = vmatprep.subr.bf16.mxu0 0
  %730 = vmatpush2.bf16.msra.mxu0 0
  %731 = vmatprep.subr.bf16.mxu0 0
  %732 = vmatpush2.bf16.msra.mxu0 0
  %733 = vmatprep.mubr.bf16.mxu0 0
  %734 = vmatmul.mubr.bf16.gmra.mxu0 %v53
  %v735 = vpop.f32.mrf.mxu0
  %v736 = vadd.f32 %v699, %v735
  %v737 = vpop.f32.mrf.mxu0
  %v738 = vpop.f32.mrf.mxu0
  %v739 = vadd.f32 %v699, %v738
  %v740 = vpop.f32.mrf.mxu0
  %741 = vdwg.mxu0
  %v742 = vlaneseq
  %v743 = vand.u32 %v742, 127
  %vm744 = vcmp.lt.s32.totalorder %v743, 4
  %v745 = vsel %vm744, %v736, -inf
  %v746 = vsel %vm744, %v739, -inf
  %747 = vmax.xlane.f32.xlu0 %v745
  %v748 = vpop.xlane.xlu0 %747
  %749 = vmax.xlane.f32.xlu0 %v746
  %v750 = vpop.xlane.xlu0 %749
  %v751 = vsub.f32 %v745, %v748
  %v752 = vsub.f32 %v746, %v750
  %v753 = vmul.f32 %v751, 1.442695
  %v754 = vpow.pop %v753
  %v755 = vmul.f32 %v752, 1.442695
  %v756 = vpow.pop %v755
  %757 = vadd.xlane.f32.xlu0 %v754
  %v758 = vpop.xlane.xlu0 %757
  %759 = vadd.xlane.f32.xlu0 %v756
  %v760 = vpop.xlane.xlu0 %759
  %v761 = vlog2.pop %v758
  %v762 = vmul.f32 %v761, 0.6931472
  %v763 = vlog2.pop %v760
  %v764 = vmul.f32 %v763, 0.6931472
  %v765 = vsub.f32 %v751, %v762
  %v766 = vsub.f32 %v752, %v764
  %767 = vst [vmem:[%s10] sm:$0xff] %v765
  %768 = vst [vmem:[%s10 + $0x8] sm:$0xff] %v766
  // Predicated region
  $region42: #{gcn_forward.1} parent=0 // pred_check
    _
  $region43: #{gcn_forward.1} parent=0 // pred_check_branch
    %770 = sbr.rel (0) target = $region45
  $region44: #{gcn_forward.1} parent=0 // pred_region
    _
  $region45: #{gcn_forward.1} parent=0 // pred_fallthru
    _
  // Predicated region
  $region46: #{gcn_forward.1} parent=0 // pred_check
    _
  $region47: #{gcn_forward.1} parent=0 // pred_check_branch
    %772 = sbr.rel (0) target = $region49
  $region48: #{gcn_forward.1} parent=0 // pred_region
    _
  $region49: #{gcn_forward.1} parent=0 // pred_fallthru
    _

</llo_original>
